<compile_context>
chip_gen: v5e
topology: v5e:2x2
jax: 0.10.0
libtpu: 0.0.40
codegen_flags: <defaults>
</compile_context>

<pallas_src>
import functools

import jax
import jax.numpy as jnp
from jax import lax
from jax.experimental import pallas as pl
from jax.experimental.pallas import tpu as pltpu


def _mlp_kernel(x_ref, w1_ref, b1_ref, w2_ref, b2_ref, w3_ref, b3_ref, o_ref, *, chunk: int):
    # Feature-major activations: (features, batch_chunk); batch lives on the lane axis.
    w1 = w1_ref[...]          # (40, 1)   lin1.weight  (out, in) == column vector
    b1 = b1_ref[...]          # (40, 1)
    w2 = w2_ref[...]          # (40, 40)  lin2.weight  (out, in) -> MXU LHS
    b2 = b2_ref[...]          # (40, 1)
    w3 = w3_ref[...]          # (40, 1)   output.weight transposed to a column
    b3 = b3_ref[0, 0]         # scalar, read from SMEM

    n_chunks = x_ref.shape[1] // chunk   # static

    def body(c, carry):
        start = pl.multiple_of(c * chunk, chunk)
        x = x_ref[:, pl.ds(start, chunk)]                            # (1, chunk)

        # Layer 1 (in_features = 1): outer product on the VPU, no MXU.
        h1 = jnp.maximum(w1 * x + b1, 0.0)                           # (40, chunk)

        # Layer 2 (40x40): MXU matmul with the batch chunk as the N dimension.
        h2 = jnp.dot(w2, h1, preferred_element_type=jnp.float32) + b2
        h2 = jnp.maximum(h2, 0.0)                                    # (40, chunk)

        # Layer 3 (out_features = 1): VPU multiply + sublane reduction (XLU).
        y = jnp.sum(w3 * h2, axis=0, keepdims=True) + b3             # (1, chunk)
        o_ref[:, pl.ds(start, chunk)] = y
        return carry

    lax.fori_loop(0, n_chunks, body, None, unroll=True)


def meta_learned_regressor(x, params, *, tile_b=2048, chunk=256):
    """x: (B, 1) float32.  params: PyTorch-layout weights/biases (see init_params)."""
    B = x.shape[0]

    chunk = int(chunk)                                   # multiple of 128 (256 fills v6e/v7x MXU)
    tile_b = int(pl.cdiv(int(tile_b), chunk) * chunk)    # tile must be a multiple of chunk
    tile_b = max(chunk, min(tile_b, pl.cdiv(B, chunk) * chunk))   # don't over-pad tiny batches
    b_pad = pl.cdiv(B, tile_b) * tile_b

    # Lane-dense batch layout: (B, 1) -> (1, B_pad), zero-padded tail (sliced off below).
    x_lanes = jnp.pad(x.reshape(B).astype(jnp.float32), (0, b_pad - B)).reshape(1, b_pad)

    # Feature-major parameter layout for the kernel.
    w1 = params["w1"].astype(jnp.float32)                            # (40, 1)
    b1 = params["b1"].astype(jnp.float32).reshape(40, 1)
    w2 = params["w2"].astype(jnp.float32)                            # (40, 40)
    b2 = params["b2"].astype(jnp.float32).reshape(40, 1)
    w3 = params["w3"].astype(jnp.float32).reshape(40, 1)             # (1, 40) -> column
    b3 = params["b3"].astype(jnp.float32).reshape(1, 1)

    resident = lambda a: pl.BlockSpec(a.shape, lambda i: (0,) * a.ndim)

    out = pl.pallas_call(
        functools.partial(_mlp_kernel, chunk=chunk),
        out_shape=jax.ShapeDtypeStruct((1, b_pad), jnp.float32),
        grid=(b_pad // tile_b,),
        in_specs=[
            pl.BlockSpec((1, tile_b), lambda i: (0, i)),             # x: per-batch-tile
            resident(w1), resident(b1),                              # weights stay VMEM-resident
            resident(w2), resident(b2),
            resident(w3),
            pl.BlockSpec(memory_space=pltpu.MemorySpace.SMEM),       # b3 scalar in SMEM
        ],
        out_specs=pl.BlockSpec((1, tile_b), lambda i: (0, i)),
        compiler_params=pltpu.CompilerParams(
            dimension_semantics=("parallel",),                       # megacore sharding on v7x
        ),
    )(x_lanes, w1, b1, w2, b2, w3, b3)

    return out[:, :B].reshape(B, 1)


def init_params(key):
    """Deterministic init with PyTorch nn.Linear layouts: weight (out, in), bias (out,)."""
    k1, k2, k3, k4, k5, k6 = jax.random.split(key, 6)

    def uni(k, shape, fan_in):
        bound = 1.0 / jnp.sqrt(jnp.float32(fan_in))
        return jax.random.uniform(k, shape, jnp.float32, -bound, bound)

    return {
        "w1": uni(k1, (40, 1), 1),
        "b1": uni(k2, (40,), 1),
        "w2": uni(k3, (40, 40), 40),
        "b2": uni(k4, (40,), 40),
        "w3": uni(k5, (1, 40), 40),
        "b3": uni(k6, (1,), 40),
    }


def reference_forward(x, params):
    # Mirrors F.linear: y = x @ W.T + b
    h1 = jnp.maximum(x @ params["w1"].T + params["b1"], 0.0)
    h2 = jnp.maximum(h1 @ params["w2"].T + params["b2"], 0.0)
    return h2 @ params["w3"].T + params["b3"]


if __name__ == "__main__":
    key = jax.random.PRNGKey(0)
    kx, kp = jax.random.split(key)

    B = 8
    x = jax.random.normal(kx, (B, 1), jnp.float32)
    params = init_params(kp)

    out = meta_learned_regressor(x, params)
    jax.block_until_ready(out)

    ref = reference_forward(x, params)
    assert out.shape == (B, 1)
    assert jnp.allclose(out, ref, atol=1e-5, rtol=1e-5), float(jnp.max(jnp.abs(out - ref)))

    print("KERNEL_OK")
</pallas_src>

<mosaic_0001>
module attributes {stable_mosaic.version = 11 : i64} {
  func.func @_mlp_kernel(%arg0: i32, %arg1: memref<1x256xf32, #tpu.memory_space<vmem>>, %arg2: memref<40x1xf32, #tpu.memory_space<vmem>>, %arg3: memref<40x1xf32, #tpu.memory_space<vmem>>, %arg4: memref<40x40xf32, #tpu.memory_space<vmem>>, %arg5: memref<40x1xf32, #tpu.memory_space<vmem>>, %arg6: memref<40x1xf32, #tpu.memory_space<vmem>>, %arg7: memref<1x1xf32, #tpu.memory_space<smem>>, %arg8: memref<1x256xf32, #tpu.memory_space<vmem>>) attributes {dimension_semantics = [#tpu.dimension_semantics<parallel>], iteration_bounds = array<i64: 1>, scalar_prefetch = 0 : i64, scratch_operands = 0 : i64, tpu.core_type = #tpu.core_type<tc>, window_params = [{transform_indices = @transform_0, window_bounds = array<i64: 1, 256>}, {pipeline_mode = #tpu.pipeline_mode<synchronous>, transform_indices = @transform_1, window_bounds = array<i64: 40, 1>}, {pipeline_mode = #tpu.pipeline_mode<synchronous>, transform_indices = @transform_2, window_bounds = array<i64: 40, 1>}, {pipeline_mode = #tpu.pipeline_mode<synchronous>, transform_indices = @transform_3, window_bounds = array<i64: 40, 40>}, {pipeline_mode = #tpu.pipeline_mode<synchronous>, transform_indices = @transform_4, window_bounds = array<i64: 40, 1>}, {pipeline_mode = #tpu.pipeline_mode<synchronous>, transform_indices = @transform_5, window_bounds = array<i64: 40, 1>}, {transform_indices = @transform_6, window_bounds = array<i64: 1, 1>}, {transform_indices = @transform_7, window_bounds = array<i64: 1, 256>}]} {
    %c0 = arith.constant 0 : index
    %c0_0 = arith.constant 0 : index
    %0 = vector.load %arg2[%c0, %c0_0] : memref<40x1xf32, #tpu.memory_space<vmem>>, vector<40x1xf32>
    %c0_1 = arith.constant 0 : index
    %c0_2 = arith.constant 0 : index
    %1 = vector.load %arg3[%c0_1, %c0_2] : memref<40x1xf32, #tpu.memory_space<vmem>>, vector<40x1xf32>
    %c0_3 = arith.constant 0 : index
    %c0_4 = arith.constant 0 : index
    %2 = vector.load %arg4[%c0_3, %c0_4] : memref<40x40xf32, #tpu.memory_space<vmem>>, vector<40x40xf32>
    %c0_5 = arith.constant 0 : index
    %c0_6 = arith.constant 0 : index
    %3 = vector.load %arg5[%c0_5, %c0_6] : memref<40x1xf32, #tpu.memory_space<vmem>>, vector<40x1xf32>
    %c0_7 = arith.constant 0 : index
    %c0_8 = arith.constant 0 : index
    %4 = vector.load %arg6[%c0_7, %c0_8] : memref<40x1xf32, #tpu.memory_space<vmem>>, vector<40x1xf32>
    %c0_9 = arith.constant 0 : index
    %c0_10 = arith.constant 0 : index
    %5 = memref.load %arg7[%c0_9, %c0_10] : memref<1x1xf32, #tpu.memory_space<smem>>
    %c0_i32 = arith.constant 0 : i32
    %c256_i32 = arith.constant 256 : i32
    %6 = arith.muli %c0_i32, %c256_i32 : i32
    %7 = tpu.assume_multiple %6, 256 : i32
    %c0_11 = arith.constant 0 : index
    %8 = arith.index_cast %7 : i32 to index
    %9 = vector.load %arg1[%c0_11, %8] : memref<1x256xf32, #tpu.memory_space<vmem>>, vector<1x256xf32>
    %10 = vector.broadcast %0 : vector<40x1xf32> to vector<40x256xf32>
    %11 = vector.broadcast %9 : vector<1x256xf32> to vector<40x256xf32>
    %12 = arith.mulf %10, %11 : vector<40x256xf32>
    %13 = vector.broadcast %1 : vector<40x1xf32> to vector<40x256xf32>
    %14 = arith.addf %12, %13 : vector<40x256xf32>
    %cst = arith.constant 0.000000e+00 : f32
    %15 = vector.broadcast %cst : f32 to vector<40x256xf32>
    %16 = arith.maximumf %14, %15 : vector<40x256xf32>
    %cst_12 = arith.constant dense<0.000000e+00> : vector<40x256xf32>
    %17 = tpu.matmul %2, %16, %cst_12 {dimension_numbers = #tpu.dot_dimension_numbers<[1], [0], [0], [1], [0, 0, 1, 1], [], []>} : vector<40x40xf32>, vector<40x256xf32>, vector<40x256xf32> -> vector<40x256xf32>
    %18 = vector.broadcast %3 : vector<40x1xf32> to vector<40x256xf32>
    %19 = arith.addf %17, %18 : vector<40x256xf32>
    %cst_13 = arith.constant 0.000000e+00 : f32
    %20 = vector.broadcast %cst_13 : f32 to vector<40x256xf32>
    %21 = arith.maximumf %19, %20 : vector<40x256xf32>
    %22 = vector.broadcast %4 : vector<40x1xf32> to vector<40x256xf32>
    %23 = arith.mulf %22, %21 : vector<40x256xf32>
    %cst_14 = arith.constant dense<0.000000e+00> : vector<256xf32>
    %24 = vector.multi_reduction <add>, %23, %cst_14 [0] : vector<40x256xf32> to vector<256xf32>
    %25 = vector.shape_cast %24 : vector<256xf32> to vector<1x256xf32>
    %26 = vector.broadcast %5 : f32 to vector<1x256xf32>
    %27 = arith.addf %25, %26 : vector<1x256xf32>
    %c0_15 = arith.constant 0 : index
    %28 = arith.index_cast %7 : i32 to index
    %29 = vector.load %arg8[%c0_15, %28] : memref<1x256xf32, #tpu.memory_space<vmem>>, vector<1x256xf32>
    tpu.vector_store %arg8[%c0_15, %28], %27 {strides = array<i32>} : memref<1x256xf32, #tpu.memory_space<vmem>>, vector<1x256xf32>,
    %c1_i32 = arith.constant 1 : i32
    return
  }
  func.func @transform_0(%arg0: i32) -> (i32, i32) {
    %c0_i32 = arith.constant 0 : i32
    %c0_i32_0 = arith.constant 0 : i32
    return %c0_i32, %arg0 : i32, i32
  }
  func.func @transform_1(%arg0: i32) -> (i32, i32) {
    %c0_i32 = arith.constant 0 : i32
    %c0_i32_0 = arith.constant 0 : i32
    %c0_i32_1 = arith.constant 0 : i32
    return %c0_i32, %c0_i32_0 : i32, i32
  }
  func.func @transform_2(%arg0: i32) -> (i32, i32) {
    %c0_i32 = arith.constant 0 : i32
    %c0_i32_0 = arith.constant 0 : i32
    %c0_i32_1 = arith.constant 0 : i32
    return %c0_i32, %c0_i32_0 : i32, i32
  }
  func.func @transform_3(%arg0: i32) -> (i32, i32) {
    %c0_i32 = arith.constant 0 : i32
    %c0_i32_0 = arith.constant 0 : i32
    %c0_i32_1 = arith.constant 0 : i32
    return %c0_i32, %c0_i32_0 : i32, i32
  }
  func.func @transform_4(%arg0: i32) -> (i32, i32) {
    %c0_i32 = arith.constant 0 : i32
    %c0_i32_0 = arith.constant 0 : i32
    %c0_i32_1 = arith.constant 0 : i32
    return %c0_i32, %c0_i32_0 : i32, i32
  }
  func.func @transform_5(%arg0: i32) -> (i32, i32) {
    %c0_i32 = arith.constant 0 : i32
    %c0_i32_0 = arith.constant 0 : i32
    %c0_i32_1 = arith.constant 0 : i32
    return %c0_i32, %c0_i32_0 : i32, i32
  }
  func.func @transform_6(%arg0: i32) -> (i32, i32) {
    %c0_i32 = arith.constant 0 : i32
    %c0_i32_0 = arith.constant 0 : i32
    %c0_i32_1 = arith.constant 0 : i32
    return %c0_i32, %c0_i32_0 : i32, i32
  }
  func.func @transform_7(%arg0: i32) -> (i32, i32) {
    %c0_i32 = arith.constant 0 : i32
    %c0_i32_0 = arith.constant 0 : i32
    return %c0_i32, %arg0 : i32, i32
  }
}

</mosaic_0001>

<llo_original>
// kernel: tpu_custom_call.1
$region0: #{tpu_custom_call.1}
  #allocation0 [shape = 'u32[]', space=smem, size = 0x4, offset = 0x4, fixed_abs, tag = 'smem constant byte address 0x4 - core index']
  #allocation1 [shape = 'u32[72,128]{1,0:T(1,128)}', space=vmem, size = 0x9000, scoped, tag = 'internal scratch']
  #allocation2 [shape = 'f32[1,1]{1,0:T(1,128)S(6)}', space=smem, size = 0x200, scoped, tag = 'scoped memory for tpu_custom_call.1']
  %s0 = inlined_call_operand.vmem [shape: f32[1,256], index: 0, kind: input, shape index: {}]
  %s1 = inlined_call_operand.vmem [shape: f32[40,1], index: 1, kind: input, shape index: {}]
  %s2 = inlined_call_operand.vmem [shape: f32[40,1], index: 2, kind: input, shape index: {}]
  %s3 = inlined_call_operand.vmem [shape: f32[40,40], index: 3, kind: input, shape index: {}]
  %s4 = inlined_call_operand.vmem [shape: f32[40,1], index: 4, kind: input, shape index: {}]
  %s5 = inlined_call_operand.vmem [shape: f32[40,1], index: 5, kind: input, shape index: {}]
  %s6 = inlined_call_operand.<no memory space> [shape: f32[1,1], index: 6, kind: input, shape index: {}]
  %s7 = inlined_call_operand.hbm [shape: f32[1,256], index: 7, kind: output, shape index: {}]
  %s8 = sld [smem:[#allocation0]]
  $region38: #{tpu_custom_call.1} parent=0
    _
  %s10 = ssub.s32 1, %s8
  %s11 = scalar_select 0, %s10, %s8
  %12 = sst [smem:[#allocation2]] %s6
  $region1: #{tpu_custom_call.1} parent=0
    #allocation3 [shape = 'u8[1024]{0}', space=vmem, size = 0x400, scoped, tag = 'output window, operand 0, single buffered']
    #allocation4 [shape = 's32[1]{0}', space=sflag, size = 0x4, scoped, tag = 'scoped memory for tpu_custom_call.1']
    %13 = vsyncpa [#allocation4], 0
    // Predicated region
    $region2: #{tpu_custom_call.1} parent=1 // pred_check
      _
    $region3: #{tpu_custom_call.1} parent=1 // pred_check_branch
      %15 = sbr.rel (0) target = $region5
    $region4: #{tpu_custom_call.1} parent=1 // pred_region
      _
    $region5: #{tpu_custom_call.1} parent=1 // pred_fallthru
      _
    // Predicated region
    $region6: #{tpu_custom_call.1} parent=1 // pred_check
      _
    $region7: #{tpu_custom_call.1} parent=1 // pred_check_branch
      %17 = sbr.rel (0) target = $region9
    $region8: #{tpu_custom_call.1} parent=1 // pred_region
      _
    $region9: #{tpu_custom_call.1} parent=1 // pred_fallthru
      _
    // Predicated region
    $region10: #{tpu_custom_call.1} parent=1 // pred_check
      _
    $region11: #{tpu_custom_call.1} parent=1 // pred_check_branch
      %19 = sbr.rel (0) target = $region13
    $region12: #{tpu_custom_call.1} parent=1 // pred_region
      _
    $region13: #{tpu_custom_call.1} parent=1 // pred_fallthru
      _
    // Predicated region
    $region14: #{tpu_custom_call.1} parent=1 // pred_check
      _
    $region15: #{tpu_custom_call.1} parent=1 // pred_check_branch
      %21 = sbr.rel (0) target = $region17
    $region16: #{tpu_custom_call.1} parent=1 // pred_region
      _
    $region17: #{tpu_custom_call.1} parent=1 // pred_fallthru
      _
    // Predicated region
    $region18: #{tpu_custom_call.1} parent=1 // pred_check
      _
    $region19: #{tpu_custom_call.1} parent=1 // pred_check_branch
      %23 = sbr.rel (0) target = $region21
    $region20: #{tpu_custom_call.1} parent=1 // pred_region
      _
    $region21: #{tpu_custom_call.1} parent=1 // pred_fallthru
      _
    // Predicated region
    $region22: #{tpu_custom_call.1} parent=1 // pred_check
      _
    $region23: #{tpu_custom_call.1} parent=1 // pred_check_branch
      %25 = sbr.rel (0) target = $region25
    $region24: #{tpu_custom_call.1} parent=1 // pred_region
      _
    $region25: #{tpu_custom_call.1} parent=1 // pred_fallthru
      _
    // Predicated region
    $region26: #{tpu_custom_call.1} parent=1 // pred_check
      _
    $region27: #{tpu_custom_call.1} parent=1 // pred_check_branch
      %27 = sbr.rel (0) target = $region29
    $region28: #{tpu_custom_call.1} parent=1 // pred_region
      _
    $region29: #{tpu_custom_call.1} parent=1 // pred_fallthru
      _
    %v28 = vld [vmem:[%s1] sm:$0xff]
    %v29 = vld [vmem:[%s1 + $0x8] sm:$0xff]
    %v30 = vld [vmem:[%s1 + $0x10] sm:$0xff]
    %v31 = vld [vmem:[%s1 + $0x18] sm:$0xff]
    %v32 = vld [vmem:[%s1 + $0x20] sm:$0xff]
    %v33 = vld [vmem:[%s2] sm:$0xff]
    %v34 = vld [vmem:[%s2 + $0x8] sm:$0xff]
    %v35 = vld [vmem:[%s2 + $0x10] sm:$0xff]
    %v36 = vld [vmem:[%s2 + $0x18] sm:$0xff]
    %v37 = vld [vmem:[%s2 + $0x20] sm:$0xff]
    %v38 = vld [vmem:[%s3] sm:$0xff]
    %v39 = vld [vmem:[%s3 + $0x8] sm:$0xff]
    %v40 = vld [vmem:[%s3 + $0x10] sm:$0xff]
    %v41 = vld [vmem:[%s3 + $0x18] sm:$0xff]
    %v42 = vld [vmem:[%s3 + $0x20] sm:$0xff]
    %v43 = vld [vmem:[%s4] sm:$0xff]
    %v44 = vld [vmem:[%s4 + $0x8] sm:$0xff]
    %v45 = vld [vmem:[%s4 + $0x10] sm:$0xff]
    %v46 = vld [vmem:[%s4 + $0x18] sm:$0xff]
    %v47 = vld [vmem:[%s4 + $0x20] sm:$0xff]
    %v48 = vld [vmem:[%s5] sm:$0xff]
    %v49 = vld [vmem:[%s5 + $0x8] sm:$0xff]
    %v50 = vld [vmem:[%s5 + $0x10] sm:$0xff]
    %v51 = vld [vmem:[%s5 + $0x18] sm:$0xff]
    %v52 = vld [vmem:[%s5 + $0x20] sm:$0xff]
    %s53 = sld [smem:[#allocation2]]
    %v54 = vld [vmem:[%s0] sm:$0x3]
    %56 = vset.pattern.permute.xlu0 0
    %57 = vperm.xlu0 %56, %v28
    %v58 = vpop.permute.xlu0 %57
    %61 = vset.pattern.permute.xlu0 0
    %62 = vperm.xlu0 %61, %v29
    %v63 = vpop.permute.xlu0 %62
    %66 = vset.pattern.permute.xlu0 0
    %67 = vperm.xlu0 %66, %v30
    %v68 = vpop.permute.xlu0 %67
    %71 = vset.pattern.permute.xlu0 0
    %72 = vperm.xlu0 %71, %v31
    %v73 = vpop.permute.xlu0 %72
    %76 = vset.pattern.permute.xlu0 0
    %77 = vperm.xlu0 %76, %v32
    %v78 = vpop.permute.xlu0 %77
    %v81 = vperm.slane %v54, 0
    %v82 = vperm.slane %v54, 1
    %v85 = vmul.f32 %v58, %v81
    %v86 = vmul.f32 %v58, %v82
    %v87 = vmul.f32 %v63, %v81
    %v88 = vmul.f32 %v63, %v82
    %v89 = vmul.f32 %v68, %v81
    %v90 = vmul.f32 %v68, %v82
    %v91 = vmul.f32 %v73, %v81
    %v92 = vmul.f32 %v73, %v82
    %v93 = vmul.f32 %v78, %v81
    %v94 = vmul.f32 %v78, %v82
    %96 = vset.pattern.permute.xlu0 0
    %97 = vperm.xlu0 %96, %v33
    %v98 = vpop.permute.xlu0 %97
    %101 = vset.pattern.permute.xlu0 0
    %102 = vperm.xlu0 %101, %v34
    %v103 = vpop.permute.xlu0 %102
    %106 = vset.pattern.permute.xlu0 0
    %107 = vperm.xlu0 %106, %v35
    %v108 = vpop.permute.xlu0 %107
    %111 = vset.pattern.permute.xlu0 0
    %112 = vperm.xlu0 %111, %v36
    %v113 = vpop.permute.xlu0 %112
    %116 = vset.pattern.permute.xlu0 0
    %117 = vperm.xlu0 %116, %v37
    %v118 = vpop.permute.xlu0 %117
    %v120 = vadd.f32 %v85, %v98
    %v121 = vadd.f32 %v86, %v98
    %v122 = vadd.f32 %v87, %v103
    %v123 = vadd.f32 %v88, %v103
    %v124 = vadd.f32 %v89, %v108
    %v125 = vadd.f32 %v90, %v108
    %v126 = vadd.f32 %v91, %v113
    %v127 = vadd.f32 %v92, %v113
    %v128 = vadd.f32 %v93, %v118
    %v129 = vadd.f32 %v94, %v118
    %v130 = vmax.f32 %v120, 0.0
    %v131 = vmax.f32 %v121, 0.0
    %v132 = vmax.f32 %v122, 0.0
    %v133 = vmax.f32 %v123, 0.0
    %v134 = vmax.f32 %v124, 0.0
    %v135 = vmax.f32 %v125, 0.0
    %v136 = vmax.f32 %v126, 0.0
    %v137 = vmax.f32 %v127, 0.0
    %v138 = vmax.f32 %v128, 0.0
    %v139 = vmax.f32 %v129, 0.0
    %141 = vset.pattern.permute.xlu0 0
    %142 = vperm.xlu0 %141, %v43
    %v143 = vpop.permute.xlu0 %142
    %146 = vset.pattern.permute.xlu0 0
    %147 = vperm.xlu0 %146, %v44
    %v148 = vpop.permute.xlu0 %147
    %151 = vset.pattern.permute.xlu0 0
    %152 = vperm.xlu0 %151, %v45
    %v153 = vpop.permute.xlu0 %152
    %156 = vset.pattern.permute.xlu0 0
    %157 = vperm.xlu0 %156, %v46
    %v158 = vpop.permute.xlu0 %157
    %161 = vset.pattern.permute.xlu0 0
    %162 = vperm.xlu0 %161, %v47
    %v163 = vpop.permute.xlu0 %162
    %vm165 = vcmask 326656
    %v167 = vsel %vm165, %v38, 0
    %v170 = vsel %vm165, %v39, 0
    %v173 = vsel %vm165, %v40, 0
    %v176 = vsel %vm165, %v41, 0
    %v179 = vsel %vm165, %v42, 0
    %181 = vmatpush.msra.mxu0 0.0
    %182 = vmatpush.msra.mxu0 0.0
    %183 = vmatpush.msra.mxu0 0.0
    %184 = vmatpush.msra.mxu0 0.0
    %185 = vmatpush.msra.mxu0 0.0
    %186 = vmatpush.msra.mxu0 0.0
    %187 = vmatpush.msra.mxu0 0.0
    %188 = vmatpush.msra.mxu0 0.0
    %189 = vmatpush.msra.mxu0 0.0
    %190 = vmatpush.msra.mxu0 0.0
    %191 = vmatpush.msra.mxu0 0.0
    %192 = vmatpush.msra.mxu0 %v138
    %193 = vmatpush.msra.mxu0 %v136
    %194 = vmatpush.msra.mxu0 %v134
    %195 = vmatpush.msra.mxu0 %v132
    %196 = vmatpush.msra.mxu0 %v130
    %197 = vmatmul.f32.gmra.mxu0 %v167
    %v198 = vpop.f32.mrf.mxu0
    %v199 = vadd.f32 %v143, %v198
    %200 = vmatmul.f32.gmra.mxu0 %v170
    %v201 = vpop.f32.mrf.mxu0
    %v202 = vadd.f32 %v148, %v201
    %203 = vmatmul.f32.gmra.mxu0 %v173
    %v204 = vpop.f32.mrf.mxu0
    %v205 = vadd.f32 %v153, %v204
    %206 = vmatmul.f32.gmra.mxu0 %v176
    %v207 = vpop.f32.mrf.mxu0
    %v208 = vadd.f32 %v158, %v207
    %209 = vmatmul.f32.gmra.mxu0 %v179
    %v210 = vpop.f32.mrf.mxu0
    %v211 = vadd.f32 %v163, %v210
    %212 = vdwg.mxu0
    %213 = vmatpush.msra.mxu0 0.0
    %214 = vmatpush.msra.mxu0 0.0
    %215 = vmatpush.msra.mxu0 0.0
    %216 = vmatpush.msra.mxu0 0.0
    %217 = vmatpush.msra.mxu0 0.0
    %218 = vmatpush.msra.mxu0 0.0
    %219 = vmatpush.msra.mxu0 0.0
    %220 = vmatpush.msra.mxu0 0.0
    %221 = vmatpush.msra.mxu0 0.0
    %222 = vmatpush.msra.mxu0 0.0
    %223 = vmatpush.msra.mxu0 0.0
    %224 = vmatpush.msra.mxu0 %v139
    %225 = vmatpush.msra.mxu0 %v137
    %226 = vmatpush.msra.mxu0 %v135
    %227 = vmatpush.msra.mxu0 %v133
    %228 = vmatpush.msra.mxu0 %v131
    %229 = vmatmul.f32.gmra.mxu0 %v167
    %v230 = vpop.f32.mrf.mxu0
    %v231 = vadd.f32 %v143, %v230
    %232 = vmatmul.f32.gmra.mxu0 %v170
    %v233 = vpop.f32.mrf.mxu0
    %v234 = vadd.f32 %v148, %v233
    %235 = vmatmul.f32.gmra.mxu0 %v173
    %v236 = vpop.f32.mrf.mxu0
    %v237 = vadd.f32 %v153, %v236
    %238 = vmatmul.f32.gmra.mxu0 %v176
    %v239 = vpop.f32.mrf.mxu0
    %v240 = vadd.f32 %v158, %v239
    %241 = vmatmul.f32.gmra.mxu0 %v179
    %v242 = vpop.f32.mrf.mxu0
    %v243 = vadd.f32 %v163, %v242
    %244 = vdwg.mxu0
    %v245 = vmax.f32 %v199, 0.0
    %v246 = vmax.f32 %v231, 0.0
    %v247 = vmax.f32 %v202, 0.0
    %v248 = vmax.f32 %v234, 0.0
    %v249 = vmax.f32 %v205, 0.0
    %v250 = vmax.f32 %v237, 0.0
    %v251 = vmax.f32 %v208, 0.0
    %v252 = vmax.f32 %v240, 0.0
    %v253 = vmax.f32 %v211, 0.0
    %v254 = vmax.f32 %v243, 0.0
    %256 = vset.pattern.permute.xlu0 0
    %257 = vperm.xlu0 %256, %v48
    %v258 = vpop.permute.xlu0 %257
    %261 = vset.pattern.permute.xlu0 0
    %262 = vperm.xlu0 %261, %v49
    %v263 = vpop.permute.xlu0 %262
    %266 = vset.pattern.permute.xlu0 0
    %267 = vperm.xlu0 %266, %v50
    %v268 = vpop.permute.xlu0 %267
    %271 = vset.pattern.permute.xlu0 0
    %272 = vperm.xlu0 %271, %v51
    %v273 = vpop.permute.xlu0 %272
    %276 = vset.pattern.permute.xlu0 0
    %277 = vperm.xlu0 %276, %v52
    %v278 = vpop.permute.xlu0 %277
    %v280 = vmul.f32 %v258, %v245
    %v281 = vmul.f32 %v258, %v246
    %v282 = vmul.f32 %v263, %v247
    %v283 = vmul.f32 %v263, %v248
    %v284 = vmul.f32 %v268, %v249
    %v285 = vmul.f32 %v268, %v250
    %v286 = vmul.f32 %v273, %v251
    %v287 = vmul.f32 %v273, %v252
    %v288 = vmul.f32 %v278, %v253
    %v289 = vmul.f32 %v278, %v254
    %v290 = vadd.f32 %v280, %v282
    %v291 = vadd.f32 %v290, %v284
    %v292 = vadd.f32 %v291, %v286
    %v293 = vadd.f32 %v292, %v288
    %v294 = vrot.slane %v293, 4
    %v295 = vadd.f32 %v293, %v294
    %v296 = vrot.slane %v295, 2
    %v297 = vadd.f32 %v295, %v296
    %v298 = vrot.slane %v297, 1
    %v299 = vadd.f32 %v297, %v298
    %v300 = vadd.f32 %v281, %v283
    %v301 = vadd.f32 %v300, %v285
    %v302 = vadd.f32 %v301, %v287
    %v303 = vadd.f32 %v302, %v289
    %v304 = vrot.slane %v303, 4
    %v305 = vadd.f32 %v303, %v304
    %v306 = vrot.slane %v305, 2
    %v307 = vadd.f32 %v305, %v306
    %v308 = vrot.slane %v307, 1
    %v309 = vadd.f32 %v307, %v308
    %v310 = vstv %s53
    %v311 = vadd.f32 %v299, %v310
    %v312 = vadd.f32 %v309, %v310
    %v315 = vrot.slane %v312, 7
    %vm316 = vcmask 1040384
    %v317 = vsel %vm316, %v311, %v315
    %v319 = vlaneseq
    %vm320 = vcmp.ge.s32.totalorder %v319, 0
    %vm321 = vcmp.lt.s32.totalorder %v319, 256
    %vm322 = vmand %vm320, %vm321
    %323 = vst.msk [vmem:[#allocation3] sm:$0x3] %vm322, %v317
    // Predicated region
    $region30: #{tpu_custom_call.1} parent=1 // pred_check
      _
    $region31: #{tpu_custom_call.1} parent=1 // pred_check_branch
      %325 = sbr.rel (0) target = $region33
    $region32: #{tpu_custom_call.1} parent=1 // pred_region
      %327 = vsyncadd [#allocation4], 0
      %s329 = sshll.u32 [#allocation3], 4
      %s330 = int_to_ptr.vmem [resolvable:$true] %s329
      %s331 = sshll.u32 %s7, 4
      %s332 = int_to_ptr.hbm [resolvable:$true] %s331
      %334 = dma.vmem_to_hbm [thread:$0]  %s330, 32, %s332, [#allocation4]
    $region33: #{tpu_custom_call.1} parent=1 // pred_fallthru
      _
    // Predicated region
    $region34: #{tpu_custom_call.1} parent=1 // pred_check
      _
    $region35: #{tpu_custom_call.1} parent=1 // pred_check_branch
      %336 = sbr.rel (0) target = $region37
    $region36: #{tpu_custom_call.1} parent=1 // pred_region
      %338 = dma.done [#allocation4], 32
    $region37: #{tpu_custom_call.1} parent=1 // pred_fallthru
      _
    %339 = vsyncpa [#allocation4], 1

</llo_original>
